<compile_context>
chip_gen: v7x
topology: tpu7x:2x2x1
jax: 0.10.0
libtpu: 0.0.40
codegen_flags: <defaults>
</compile_context>

<pallas_src>
import numpy as np
import jax
import jax.numpy as jnp
from jax.scipy.linalg import block_diag
from jax.experimental import pallas as pl
from jax.experimental.pallas import tpu as pltpu


def _fmv_kernel(linsp_ref, xd_ref, sp_ref, w1ex_ref, b1_ref,
                w2bd_ref, b2_ref, g_ref, wld_ref, bld_ref, out_ref):
    f32 = jnp.float32

    # --- hidden activations for every field ---
    # sparse fields: ReLU of gathered Embedding(voc, units) rows (streamed as bf16).
    h_sp = jnp.maximum(sp_ref[...].astype(f32), 0.0)                          # (TB, ns*units)
    # dense fields: per-field Linear(1, units) via block-diagonal expansion matmul.
    xd = xd_ref[...]                                                          # (TB, nd)
    h_dn = jnp.maximum(
        jnp.dot(xd, w1ex_ref[...], preferred_element_type=f32) + b1_ref[...],
        0.0)                                                                  # (TB, nd*units)
    # both halves are multiples of 128 lanes -> cheap lane concatenation.
    h = jnp.concatenate([h_sp, h_dn], axis=-1)                                # (TB, F*units)

    # --- all per-field Linear(units, E) in one K = F*units matmul (block-diag weight) ---
    v = jnp.dot(h, w2bd_ref[...], preferred_element_type=f32) + b2_ref[...]   # (TB, F*E)

    # --- FM cross term: 0.5 * sum_e [(sum_f v)^2 - sum_f v^2] ---
    # s[b, f*E+e] = sum_f' v[b, f'*E+e]  (per-embedding-dim field sums, F*E lanes wide)
    s = jnp.dot(v, g_ref[...], preferred_element_type=f32)                    # (TB, F*E)
    cross = 0.5 * jnp.sum(v * (s - v), axis=-1, keepdims=True)                # (TB, 1)

    # --- first-order (linear) part ---
    lin = (jnp.sum(linsp_ref[...], axis=-1, keepdims=True)
           + jnp.sum(xd * wld_ref[...], axis=-1, keepdims=True)
           + bld_ref[0])                                                      # (TB, 1)

    out_ref[...] = lin + cross


def _round_up(x, m):
    return -(-x // m) * m


def fmv_forward(params, x_sparse, x_dense, *, embed_dim, units, block_b=None):
    B, ns = x_sparse.shape
    nd = x_dense.shape[1]
    F = ns + nd
    E = embed_dim
    f32 = jnp.float32

    # ---- glue: data-dependent embedding gathers (outside the kernel) ----
    lin_sp = jnp.concatenate(
        [params["lin_emb"][i][x_sparse[:, i]] for i in range(ns)], axis=1
    ).astype(f32)                                                             # (B, ns)
    sp_flat = jnp.concatenate(
        [params["o2_sp_emb"][i][x_sparse[:, i], :] for i in range(ns)], axis=1
    ).astype(jnp.bfloat16)                                                    # (B, ns*units) bf16
    x_dense = x_dense.astype(f32)                                             # (B, nd)

    # ---- pack weights into kernel-friendly resident 2-D operands (tiny, once per call) ----
    w1ex = block_diag(
        *[params["o2_dn_w1"][j].reshape(1, units) for j in range(nd)])        # (nd, nd*units)
    b1_flat = jnp.concatenate(
        [params["o2_dn_b1"][j] for j in range(nd)]).reshape(1, nd * units)    # (1, nd*units)
    w2bd = block_diag(
        *([params["o2_sp_w"][i] for i in range(ns)]
          + [params["o2_dn_w2"][j] for j in range(nd)]))                      # (F*units, F*E)
    b2_flat = jnp.concatenate(
        [params["o2_sp_b"][i] for i in range(ns)]
        + [params["o2_dn_b2"][j] for j in range(nd)]).reshape(1, F * E)       # (1, F*E)
    g = jnp.asarray(np.tile(np.eye(E, dtype=np.float32), (F, F)))             # (F*E, F*E)
    wld_row = params["lin_dense_w"].reshape(1, nd).astype(f32)                # (1, nd)
    bld = params["lin_dense_b"].reshape(1).astype(f32)                        # (1,)  -> SMEM

    # ---- batch tiling ----
    if block_b is None:
        block_b = 128 if B >= 128 else _round_up(B, 16)
    tb = block_b
    bp = _round_up(B, tb)
    if bp != B:
        pad = ((0, bp - B), (0, 0))
        lin_sp = jnp.pad(lin_sp, pad)
        sp_flat = jnp.pad(sp_flat, pad)
        x_dense = jnp.pad(x_dense, pad)

    stream = lambda w: pl.BlockSpec((tb, w), lambda i: (i, 0))
    resident = lambda r, c: pl.BlockSpec((r, c), lambda i: (0, 0))

    out = pl.pallas_call(
        _fmv_kernel,
        out_shape=jax.ShapeDtypeStruct((bp, 1), f32),
        grid=(bp // tb,),
        in_specs=[
            stream(ns),                                         # lin_sp
            stream(nd),                                         # x_dense
            stream(ns * units),                                 # sp_flat (bf16)
            resident(nd, nd * units),                           # w1ex
            resident(1, nd * units),                            # b1
            resident(F * units, F * E),                         # w2bd
            resident(1, F * E),                                 # b2
            resident(F * E, F * E),                             # g
            resident(1, nd),                                    # wld
            pl.BlockSpec(memory_space=pltpu.MemorySpace.SMEM),  # bld scalar
        ],
        out_specs=pl.BlockSpec((tb, 1), lambda i: (i, 0)),
        compiler_params=pltpu.CompilerParams(
            dimension_semantics=("parallel",),
            vmem_limit_bytes=32 * 1024 * 1024),
    )(lin_sp, x_dense, sp_flat, w1ex, b1_flat, w2bd, b2_flat, g, wld_row, bld)
    return out[:B]


def fmv_reference(params, x_sparse, x_dense, *, quantize_sparse=False):
    """Pure-JAX mirror of the PyTorch FMV forward (eval mode)."""
    B, ns = x_sparse.shape
    nd = x_dense.shape[1]
    f32 = jnp.float32
    x_dense = x_dense.astype(f32)

    lin = sum(params["lin_emb"][i][x_sparse[:, i]] for i in range(ns))        # (B, 1)
    lin = lin + x_dense @ params["lin_dense_w"] + params["lin_dense_b"]

    fields = []
    for i in range(ns):
        e = params["o2_sp_emb"][i][x_sparse[:, i], :]
        if quantize_sparse:   # match the kernel's bf16 streaming of these activations
            e = e.astype(jnp.bfloat16).astype(f32)
        fields.append(jnp.maximum(e, 0.0) @ params["o2_sp_w"][i] + params["o2_sp_b"][i])
    for j in range(nd):
        u = jnp.maximum(x_dense[:, j:j + 1] * params["o2_dn_w1"][j][None, :]
                        + params["o2_dn_b1"][j][None, :], 0.0)
        fields.append(u @ params["o2_dn_w2"][j] + params["o2_dn_b2"][j])
    order2 = jnp.stack(fields, axis=1)                                        # (B, F, E)

    square_of_sum = jnp.sum(order2, axis=1) ** 2
    sum_of_square = jnp.sum(order2 ** 2, axis=1)
    cross = 0.5 * jnp.sum(square_of_sum - sum_of_square, axis=1, keepdims=True)
    return lin + cross


def init_params(key, sparse_dims, dense_dim, embed_dim, units):
    ns = len(sparse_dims)
    keys = iter(jax.random.split(key, 4 * ns + 4 * dense_dim + 4))
    nrm = lambda s: (0.1 * jax.random.normal(next(keys), s)).astype(jnp.float32)
    return {
        "lin_emb":    [nrm((v, 1)) for v in sparse_dims],
        "o2_sp_emb":  [nrm((v, units)) for v in sparse_dims],
        "o2_sp_w":    [nrm((units, embed_dim)) for _ in sparse_dims],
        "o2_sp_b":    [nrm((embed_dim,)) for _ in sparse_dims],
        "lin_dense_w": nrm((dense_dim, 1)),
        "lin_dense_b": nrm((1,)),
        "o2_dn_w1":   [nrm((units,)) for _ in range(dense_dim)],
        "o2_dn_b1":   [nrm((units,)) for _ in range(dense_dim)],
        "o2_dn_w2":   [nrm((units, embed_dim)) for _ in range(dense_dim)],
        "o2_dn_b2":   [nrm((embed_dim,)) for _ in range(dense_dim)],
    }


if __name__ == "__main__":
    sparse_dims = [11, 17, 23, 29]
    dense_dim = 4
    embed_dim = 8
    units = 64
    B = 64

    root = jax.random.PRNGKey(0)
    kp, kx, kd = jax.random.split(root, 3)
    params = init_params(kp, sparse_dims, dense_dim, embed_dim, units)

    xkeys = jax.random.split(kx, len(sparse_dims))
    x_sparse = jnp.stack(
        [jax.random.randint(xkeys[i], (B,), 0, sparse_dims[i], dtype=jnp.int32)
         for i in range(len(sparse_dims))], axis=1)                           # (B, ns) int32
    x_dense = jax.random.normal(kd, (B, dense_dim), dtype=jnp.float32)        # (B, nd) f32

    out = fmv_forward(params, x_sparse, x_dense,
                      embed_dim=embed_dim, units=units, block_b=16)           # 4 grid steps
    out = jax.block_until_ready(out)

    ref = fmv_reference(params, x_sparse, x_dense, quantize_sparse=True)
    np.testing.assert_allclose(np.asarray(out), np.asarray(ref), rtol=1e-2, atol=1e-2)
    print("KERNEL_OK")
</pallas_src>

<mosaic_0001>
module attributes {stable_mosaic.version = 11 : i64} {
  func.func @_fmv_kernel(%arg0: i32, %arg1: memref<16x4xf32, #tpu.memory_space<vmem>>, %arg2: memref<16x4xf32, #tpu.memory_space<vmem>>, %arg3: memref<16x256xbf16, #tpu.memory_space<vmem>>, %arg4: memref<4x256xf32, #tpu.memory_space<vmem>>, %arg5: memref<1x256xf32, #tpu.memory_space<vmem>>, %arg6: memref<512x64xf32, #tpu.memory_space<vmem>>, %arg7: memref<1x64xf32, #tpu.memory_space<vmem>>, %arg8: memref<64x64xf32, #tpu.memory_space<vmem>>, %arg9: memref<1x4xf32, #tpu.memory_space<vmem>>, %arg10: memref<1xf32, #tpu.memory_space<smem>>, %arg11: memref<16x1xf32, #tpu.memory_space<vmem>>) attributes {dimension_semantics = [#tpu.dimension_semantics<parallel>], iteration_bounds = array<i64: 4>, scalar_prefetch = 0 : i64, scratch_operands = 0 : i64, tpu.core_type = #tpu.core_type<tc>, window_params = [{transform_indices = @transform_0, window_bounds = array<i64: 16, 4>}, {transform_indices = @transform_1, window_bounds = array<i64: 16, 4>}, {transform_indices = @transform_2, window_bounds = array<i64: 16, 256>}, {pipeline_mode = #tpu.pipeline_mode<synchronous>, transform_indices = @transform_3, window_bounds = array<i64: 4, 256>}, {pipeline_mode = #tpu.pipeline_mode<synchronous>, transform_indices = @transform_4, window_bounds = array<i64: 1, 256>}, {pipeline_mode = #tpu.pipeline_mode<synchronous>, transform_indices = @transform_5, window_bounds = array<i64: 512, 64>}, {pipeline_mode = #tpu.pipeline_mode<synchronous>, transform_indices = @transform_6, window_bounds = array<i64: 1, 64>}, {pipeline_mode = #tpu.pipeline_mode<synchronous>, transform_indices = @transform_7, window_bounds = array<i64: 64, 64>}, {pipeline_mode = #tpu.pipeline_mode<synchronous>, transform_indices = @transform_8, window_bounds = array<i64: 1, 4>}, {transform_indices = @transform_9, window_bounds = array<i64: 1>}, {transform_indices = @transform_10, window_bounds = array<i64: 16, 1>}]} {
    %c0 = arith.constant 0 : index
    %c0_0 = arith.constant 0 : index
    %0 = vector.load %arg3[%c0, %c0_0] : memref<16x256xbf16, #tpu.memory_space<vmem>>, vector<16x256xbf16>
    %1 = arith.extf %0 : vector<16x256xbf16> to vector<16x256xf32>
    %cst = arith.constant 0.000000e+00 : f32
    %2 = vector.broadcast %cst : f32 to vector<16x256xf32>
    %3 = arith.maximumf %1, %2 : vector<16x256xf32>
    %c0_1 = arith.constant 0 : index
    %c0_2 = arith.constant 0 : index
    %4 = vector.load %arg2[%c0_1, %c0_2] : memref<16x4xf32, #tpu.memory_space<vmem>>, vector<16x4xf32>
    %c0_3 = arith.constant 0 : index
    %c0_4 = arith.constant 0 : index
    %5 = vector.load %arg4[%c0_3, %c0_4] : memref<4x256xf32, #tpu.memory_space<vmem>>, vector<4x256xf32>
    %cst_5 = arith.constant dense<0.000000e+00> : vector<16x256xf32>
    %6 = tpu.matmul %4, %5, %cst_5 {dimension_numbers = #tpu.dot_dimension_numbers<[1], [0], [0], [1], [0, 0, 1, 1], [], []>} : vector<16x4xf32>, vector<4x256xf32>, vector<16x256xf32> -> vector<16x256xf32>
    %c0_6 = arith.constant 0 : index
    %c0_7 = arith.constant 0 : index
    %7 = vector.load %arg5[%c0_6, %c0_7] : memref<1x256xf32, #tpu.memory_space<vmem>>, vector<1x256xf32>
    %8 = vector.broadcast %7 : vector<1x256xf32> to vector<16x256xf32>
    %9 = arith.addf %6, %8 : vector<16x256xf32>
    %cst_8 = arith.constant 0.000000e+00 : f32
    %10 = vector.broadcast %cst_8 : f32 to vector<16x256xf32>
    %11 = arith.maximumf %9, %10 : vector<16x256xf32>
    %12 = tpu.concatenate %3, %11 in 1 : vector<16x256xf32>, vector<16x256xf32> -> vector<16x512xf32>
    %c0_9 = arith.constant 0 : index
    %c0_10 = arith.constant 0 : index
    %13 = vector.load %arg6[%c0_9, %c0_10] : memref<512x64xf32, #tpu.memory_space<vmem>>, vector<512x64xf32>
    %cst_11 = arith.constant dense<0.000000e+00> : vector<16x64xf32>
    %14 = tpu.matmul %12, %13, %cst_11 {dimension_numbers = #tpu.dot_dimension_numbers<[1], [0], [0], [1], [0, 0, 1, 1], [], []>} : vector<16x512xf32>, vector<512x64xf32>, vector<16x64xf32> -> vector<16x64xf32>
    %c0_12 = arith.constant 0 : index
    %c0_13 = arith.constant 0 : index
    %15 = vector.load %arg7[%c0_12, %c0_13] : memref<1x64xf32, #tpu.memory_space<vmem>>, vector<1x64xf32>
    %16 = vector.broadcast %15 : vector<1x64xf32> to vector<16x64xf32>
    %17 = arith.addf %14, %16 : vector<16x64xf32>
    %c0_14 = arith.constant 0 : index
    %c0_15 = arith.constant 0 : index
    %18 = vector.load %arg8[%c0_14, %c0_15] : memref<64x64xf32, #tpu.memory_space<vmem>>, vector<64x64xf32>
    %cst_16 = arith.constant dense<0.000000e+00> : vector<16x64xf32>
    %19 = tpu.matmul %17, %18, %cst_16 {dimension_numbers = #tpu.dot_dimension_numbers<[1], [0], [0], [1], [0, 0, 1, 1], [], []>} : vector<16x64xf32>, vector<64x64xf32>, vector<16x64xf32> -> vector<16x64xf32>
    %20 = arith.subf %19, %17 : vector<16x64xf32>
    %21 = arith.mulf %17, %20 : vector<16x64xf32>
    %cst_17 = arith.constant dense<0.000000e+00> : vector<16xf32>
    %22 = vector.multi_reduction <add>, %21, %cst_17 [1] : vector<16x64xf32> to vector<16xf32>
    %23 = vector.shape_cast %22 : vector<16xf32> to vector<16x1xf32>
    %cst_18 = arith.constant 5.000000e-01 : f32
    %24 = vector.broadcast %cst_18 : f32 to vector<16x1xf32>
    %25 = arith.mulf %24, %23 : vector<16x1xf32>
    %c0_19 = arith.constant 0 : index
    %c0_20 = arith.constant 0 : index
    %26 = vector.load %arg1[%c0_19, %c0_20] : memref<16x4xf32, #tpu.memory_space<vmem>>, vector<16x4xf32>
    %cst_21 = arith.constant dense<0.000000e+00> : vector<16xf32>
    %27 = vector.multi_reduction <add>, %26, %cst_21 [1] : vector<16x4xf32> to vector<16xf32>
    %28 = vector.shape_cast %27 : vector<16xf32> to vector<16x1xf32>
    %c0_22 = arith.constant 0 : index
    %c0_23 = arith.constant 0 : index
    %29 = vector.load %arg9[%c0_22, %c0_23] : memref<1x4xf32, #tpu.memory_space<vmem>>, vector<1x4xf32>
    %30 = vector.broadcast %29 : vector<1x4xf32> to vector<16x4xf32>
    %31 = arith.mulf %4, %30 : vector<16x4xf32>
    %cst_24 = arith.constant dense<0.000000e+00> : vector<16xf32>
    %32 = vector.multi_reduction <add>, %31, %cst_24 [1] : vector<16x4xf32> to vector<16xf32>
    %33 = vector.shape_cast %32 : vector<16xf32> to vector<16x1xf32>
    %34 = arith.addf %28, %33 : vector<16x1xf32>
    %c0_25 = arith.constant 0 : index
    %35 = memref.load %arg10[%c0_25] : memref<1xf32, #tpu.memory_space<smem>>
    %36 = vector.broadcast %35 : f32 to vector<16x1xf32>
    %37 = arith.addf %34, %36 : vector<16x1xf32>
    %38 = arith.addf %37, %25 : vector<16x1xf32>
    %c0_26 = arith.constant 0 : index
    %c0_27 = arith.constant 0 : index
    %39 = vector.load %arg11[%c0_26, %c0_27] : memref<16x1xf32, #tpu.memory_space<vmem>>, vector<16x1xf32>
    tpu.vector_store %arg11[%c0_26, %c0_27], %38 {strides = array<i32>} : memref<16x1xf32, #tpu.memory_space<vmem>>, vector<16x1xf32>,
    return
  }
  func.func @transform_0(%arg0: i32) -> (i32, i32) {
    %c0_i32 = arith.constant 0 : i32
    %c0_i32_0 = arith.constant 0 : i32
    return %arg0, %c0_i32 : i32, i32
  }
  func.func @transform_1(%arg0: i32) -> (i32, i32) {
    %c0_i32 = arith.constant 0 : i32
    %c0_i32_0 = arith.constant 0 : i32
    return %arg0, %c0_i32 : i32, i32
  }
  func.func @transform_2(%arg0: i32) -> (i32, i32) {
    %c0_i32 = arith.constant 0 : i32
    %c0_i32_0 = arith.constant 0 : i32
    return %arg0, %c0_i32 : i32, i32
  }
  func.func @transform_3(%arg0: i32) -> (i32, i32) {
    %c0_i32 = arith.constant 0 : i32
    %c0_i32_0 = arith.constant 0 : i32
    %c0_i32_1 = arith.constant 0 : i32
    return %c0_i32, %c0_i32_0 : i32, i32
  }
  func.func @transform_4(%arg0: i32) -> (i32, i32) {
    %c0_i32 = arith.constant 0 : i32
    %c0_i32_0 = arith.constant 0 : i32
    %c0_i32_1 = arith.constant 0 : i32
    return %c0_i32, %c0_i32_0 : i32, i32
  }
  func.func @transform_5(%arg0: i32) -> (i32, i32) {
    %c0_i32 = arith.constant 0 : i32
    %c0_i32_0 = arith.constant 0 : i32
    %c0_i32_1 = arith.constant 0 : i32
    return %c0_i32, %c0_i32_0 : i32, i32
  }
  func.func @transform_6(%arg0: i32) -> (i32, i32) {
    %c0_i32 = arith.constant 0 : i32
    %c0_i32_0 = arith.constant 0 : i32
    %c0_i32_1 = arith.constant 0 : i32
    return %c0_i32, %c0_i32_0 : i32, i32
  }
  func.func @transform_7(%arg0: i32) -> (i32, i32) {
    %c0_i32 = arith.constant 0 : i32
    %c0_i32_0 = arith.constant 0 : i32
    %c0_i32_1 = arith.constant 0 : i32
    return %c0_i32, %c0_i32_0 : i32, i32
  }
  func.func @transform_8(%arg0: i32) -> (i32, i32) {
    %c0_i32 = arith.constant 0 : i32
    %c0_i32_0 = arith.constant 0 : i32
    %c0_i32_1 = arith.constant 0 : i32
    return %c0_i32, %c0_i32_0 : i32, i32
  }
  func.func @transform_9(%arg0: i32) -> i32 {
    %c0_i32 = arith.constant 0 : i32
    %c0_i32_0 = arith.constant 0 : i32
    return %c0_i32 : i32
  }
  func.func @transform_10(%arg0: i32) -> (i32, i32) {
    %c0_i32 = arith.constant 0 : i32
    %c0_i32_0 = arith.constant 0 : i32
    return %arg0, %c0_i32 : i32, i32
  }
}

</mosaic_0001>

<llo_original>
// kernel: tpu_custom_call.1
$region0: #{tpu_custom_call.1}
  #allocation0 [shape = 'u32[]', space=smem, size = 0x4, offset = 0x4, fixed_abs, tag = 'smem constant byte address 0x4 - core index']
  #allocation1 [shape = 'u32[144,128]{1,0:T(1,128)}', space=vmem, size = 0x12000, scoped, tag = 'internal scratch']
  #allocation2 [shape = 'f32[1]{0:T(128)S(6)}', space=smem, size = 0x200, scoped, tag = 'scoped memory for tpu_custom_call.1']
  %s0 = inlined_call_operand.vmem [shape: f32[64,4], index: 0, kind: input, shape index: {}]
  %s1 = inlined_call_operand.vmem [shape: f32[64,4], index: 1, kind: input, shape index: {}]
  %s2 = inlined_call_operand.vmem [shape: bf16[64,256], index: 2, kind: input, shape index: {}]
  %s3 = inlined_call_operand.vmem [shape: f32[4,256], index: 3, kind: input, shape index: {}]
  %s4 = inlined_call_operand.vmem [shape: f32[1,256], index: 4, kind: input, shape index: {}]
  %s5 = inlined_call_operand.vmem [shape: f32[512,64], index: 5, kind: input, shape index: {}]
  %s6 = inlined_call_operand.vmem [shape: f32[1,64], index: 6, kind: input, shape index: {}]
  %s7 = inlined_call_operand.vmem [shape: f32[64,64], index: 7, kind: input, shape index: {}]
  %s8 = inlined_call_operand.vmem [shape: f32[1,4], index: 8, kind: input, shape index: {}]
  %s9 = inlined_call_operand.<no memory space> [shape: f32[1], index: 9, kind: input, shape index: {}]
  %s10 = inlined_call_operand.vmem [shape: f32[64,1], index: 10, kind: output, shape index: {}]
  %s11 = sld [smem:[#allocation0]]
  $region73: #{tpu_custom_call.1} parent=0
    _
  %s13 = ssub.s32 1, %s11
  %s14 = scalar_select 0, %s13, %s11
  %15 = sst [smem:[#allocation2]] %s9
  loop: start=0, step=1, limit=6
  $region2: #{tpu_custom_call.1} parent=0 // loop_pre_header
    _
  $region3: #{tpu_custom_call.1} parent=0 // loop_header
    %s17 = sphi 0, %s21
    %p18 = scmp.ge.s32.totalorder %s17, 6
    %s27 = sphi 0, %s29
    %s30 = sphi 0, %s27
    %s31 = sphi 0, %s30
    %s47 = sphi 0, %s31
    %s53 = sphi 0, %s55
    %s56 = sphi 0, %s53
    %s57 = sphi 0, %s56
    %s73 = sphi 0, %s57
    %s79 = sphi 0, %s81
    %s82 = sphi 0, %s79
    %s83 = sphi 0, %s82
    %s99 = sphi 0, %s83
    %s103 = sphi 0, %s103
    %s105 = sphi 0, %s103
    %s106 = sphi 0, %s105
    %s120 = sphi 0, %s106
    %s124 = sphi 0, %s124
    %s126 = sphi 0, %s124
    %s127 = sphi 0, %s126
    %s141 = sphi 0, %s127
    %s145 = sphi 0, %s145
    %s147 = sphi 0, %s145
    %s148 = sphi 0, %s147
    %s162 = sphi 0, %s148
    %s166 = sphi 0, %s166
    %s168 = sphi 0, %s166
    %s169 = sphi 0, %s168
    %s183 = sphi 0, %s169
    %s187 = sphi 0, %s187
    %s189 = sphi 0, %s187
    %s190 = sphi 0, %s189
    %s204 = sphi 0, %s190
    %s208 = sphi 0, %s208
    %s210 = sphi 0, %s208
    %s211 = sphi 0, %s210
    %s225 = sphi 0, %s211
    %s229 = sphi 0, %s229
    %s231 = sphi 0, %s229
    %s232 = sphi 0, %s231
    %s246 = sphi 0, %s232
    %s252 = sphi 0, %s254
    %s255 = sphi 0, %s252
    %s256 = sphi 0, %s255
    %s272 = sphi 0, %s256
  $region4: #{tpu_custom_call.1} parent=0 // loop_header_branch
    %20 = sbr.rel (%p18) target = $region8
  $region5: #{tpu_custom_call.1} parent=0 // loop_body
    %s22 = ssub.s32 %s17, 1
    %s23 = ssub.s32 %s17, 2
    %s24 = sadd.s32 %s17, 1
    %s25 = ssub.s32 %s17, %s24
    %p26 = scmp.eq.s32.totalorder %s25, 0
    %s28 = sadd.s32 %s27, 1
    %s29 = scalar_select %p26, %s27, %s28
    %p32 = pneg %p26
    %p33 = scmp.eq.s32.totalorder %s17, 3
    %p34 = por %p32, %p33
    %p35 = scmp.ne.s32.totalorder %s27, %s30
    %p36 = scmp.eq.s32.totalorder %s17, 0
    %p37 = por %p35, %p36
    %p38 = scmp.ne.s32.totalorder %s27, %s30
    %p39 = scmp.eq.s32.totalorder %s22, 3
    %p40 = por %p38, %p39
    %p41 = scmp.ne.s32.totalorder %s30, %s31
    %p42 = scmp.eq.s32.totalorder %s22, 0
    %p43 = por %p41, %p42
    %p44 = scmp.ne.s32.totalorder %s30, %s31
    %p45 = scmp.eq.s32.totalorder %s23, 3
    %p46 = por %p44, %p45
    %p48 = scmp.ne.s32.totalorder %s31, %s47
    %p49 = scmp.eq.s32.totalorder %s23, 0
    %p50 = por %p48, %p49
    %s51 = ssub.s32 %s17, %s24
    %p52 = scmp.eq.s32.totalorder %s51, 0
    %s54 = sadd.s32 %s53, 1
    %s55 = scalar_select %p52, %s53, %s54
    %p58 = pneg %p52
    %p59 = scmp.eq.s32.totalorder %s17, 3
    %p60 = por %p58, %p59
    %p61 = scmp.ne.s32.totalorder %s53, %s56
    %p62 = scmp.eq.s32.totalorder %s17, 0
    %p63 = por %p61, %p62
    %p64 = scmp.ne.s32.totalorder %s53, %s56
    %p65 = scmp.eq.s32.totalorder %s22, 3
    %p66 = por %p64, %p65
    %p67 = scmp.ne.s32.totalorder %s56, %s57
    %p68 = scmp.eq.s32.totalorder %s22, 0
    %p69 = por %p67, %p68
    %p70 = scmp.ne.s32.totalorder %s56, %s57
    %p71 = scmp.eq.s32.totalorder %s23, 3
    %p72 = por %p70, %p71
    %p74 = scmp.ne.s32.totalorder %s57, %s73
    %p75 = scmp.eq.s32.totalorder %s23, 0
    %p76 = por %p74, %p75
    %s77 = ssub.s32 %s17, %s24
    %p78 = scmp.eq.s32.totalorder %s77, 0
    %s80 = sadd.s32 %s79, 1
    %s81 = scalar_select %p78, %s79, %s80
    %p84 = pneg %p78
    %p85 = scmp.eq.s32.totalorder %s17, 3
    %p86 = por %p84, %p85
    %p87 = scmp.ne.s32.totalorder %s79, %s82
    %p88 = scmp.eq.s32.totalorder %s17, 0
    %p89 = por %p87, %p88
    %p90 = scmp.ne.s32.totalorder %s79, %s82
    %p91 = scmp.eq.s32.totalorder %s22, 3
    %p92 = por %p90, %p91
    %p93 = scmp.ne.s32.totalorder %s82, %s83
    %p94 = scmp.eq.s32.totalorder %s22, 0
    %p95 = por %p93, %p94
    %p96 = scmp.ne.s32.totalorder %s82, %s83
    %p97 = scmp.eq.s32.totalorder %s23, 3
    %p98 = por %p96, %p97
    %p100 = scmp.ne.s32.totalorder %s83, %s99
    %p101 = scmp.eq.s32.totalorder %s23, 0
    %p102 = por %p100, %p101
    %s104 = sadd.s32 %s103, 1
    %p107 = scmp.eq.s32.totalorder %s17, 3
    %p108 = scmp.ne.s32.totalorder %s103, %s105
    %p109 = scmp.eq.s32.totalorder %s17, 0
    %p110 = por %p108, %p109
    %p111 = scmp.ne.s32.totalorder %s103, %s105
    %p112 = scmp.eq.s32.totalorder %s22, 3
    %p113 = por %p111, %p112
    %p114 = scmp.ne.s32.totalorder %s105, %s106
    %p115 = scmp.eq.s32.totalorder %s22, 0
    %p116 = por %p114, %p115
    %p117 = scmp.ne.s32.totalorder %s105, %s106
    %p118 = scmp.eq.s32.totalorder %s23, 3
    %p119 = por %p117, %p118
    %p121 = scmp.ne.s32.totalorder %s106, %s120
    %p122 = scmp.eq.s32.totalorder %s23, 0
    %p123 = por %p121, %p122
    %s125 = sadd.s32 %s124, 1
    %p128 = scmp.eq.s32.totalorder %s17, 3
    %p129 = scmp.ne.s32.totalorder %s124, %s126
    %p130 = scmp.eq.s32.totalorder %s17, 0
    %p131 = por %p129, %p130
    %p132 = scmp.ne.s32.totalorder %s124, %s126
    %p133 = scmp.eq.s32.totalorder %s22, 3
    %p134 = por %p132, %p133
    %p135 = scmp.ne.s32.totalorder %s126, %s127
    %p136 = scmp.eq.s32.totalorder %s22, 0
    %p137 = por %p135, %p136
    %p138 = scmp.ne.s32.totalorder %s126, %s127
    %p139 = scmp.eq.s32.totalorder %s23, 3
    %p140 = por %p138, %p139
    %p142 = scmp.ne.s32.totalorder %s127, %s141
    %p143 = scmp.eq.s32.totalorder %s23, 0
    %p144 = por %p142, %p143
    %s146 = sadd.s32 %s145, 1
    %p149 = scmp.eq.s32.totalorder %s17, 3
    %p150 = scmp.ne.s32.totalorder %s145, %s147
    %p151 = scmp.eq.s32.totalorder %s17, 0
    %p152 = por %p150, %p151
    %p153 = scmp.ne.s32.totalorder %s145, %s147
    %p154 = scmp.eq.s32.totalorder %s22, 3
    %p155 = por %p153, %p154
    %p156 = scmp.ne.s32.totalorder %s147, %s148
    %p157 = scmp.eq.s32.totalorder %s22, 0
    %p158 = por %p156, %p157
    %p159 = scmp.ne.s32.totalorder %s147, %s148
    %p160 = scmp.eq.s32.totalorder %s23, 3
    %p161 = por %p159, %p160
    %p163 = scmp.ne.s32.totalorder %s148, %s162
    %p164 = scmp.eq.s32.totalorder %s23, 0
    %p165 = por %p163, %p164
    %s167 = sadd.s32 %s166, 1
    %p170 = scmp.eq.s32.totalorder %s17, 3
    %p171 = scmp.ne.s32.totalorder %s166, %s168
    %p172 = scmp.eq.s32.totalorder %s17, 0
    %p173 = por %p171, %p172
    %p174 = scmp.ne.s32.totalorder %s166, %s168
    %p175 = scmp.eq.s32.totalorder %s22, 3
    %p176 = por %p174, %p175
    %p177 = scmp.ne.s32.totalorder %s168, %s169
    %p178 = scmp.eq.s32.totalorder %s22, 0
    %p179 = por %p177, %p178
    %p180 = scmp.ne.s32.totalorder %s168, %s169
    %p181 = scmp.eq.s32.totalorder %s23, 3
    %p182 = por %p180, %p181
    %p184 = scmp.ne.s32.totalorder %s169, %s183
    %p185 = scmp.eq.s32.totalorder %s23, 0
    %p186 = por %p184, %p185
    %s188 = sadd.s32 %s187, 1
    %p191 = scmp.eq.s32.totalorder %s17, 3
    %p192 = scmp.ne.s32.totalorder %s187, %s189
    %p193 = scmp.eq.s32.totalorder %s17, 0
    %p194 = por %p192, %p193
    %p195 = scmp.ne.s32.totalorder %s187, %s189
    %p196 = scmp.eq.s32.totalorder %s22, 3
    %p197 = por %p195, %p196
    %p198 = scmp.ne.s32.totalorder %s189, %s190
    %p199 = scmp.eq.s32.totalorder %s22, 0
    %p200 = por %p198, %p199
    %p201 = scmp.ne.s32.totalorder %s189, %s190
    %p202 = scmp.eq.s32.totalorder %s23, 3
    %p203 = por %p201, %p202
    %p205 = scmp.ne.s32.totalorder %s190, %s204
    %p206 = scmp.eq.s32.totalorder %s23, 0
    %p207 = por %p205, %p206
    %s209 = sadd.s32 %s208, 1
    %p212 = scmp.eq.s32.totalorder %s17, 3
    %p213 = scmp.ne.s32.totalorder %s208, %s210
    %p214 = scmp.eq.s32.totalorder %s17, 0
    %p215 = por %p213, %p214
    %p216 = scmp.ne.s32.totalorder %s208, %s210
    %p217 = scmp.eq.s32.totalorder %s22, 3
    %p218 = por %p216, %p217
    %p219 = scmp.ne.s32.totalorder %s210, %s211
    %p220 = scmp.eq.s32.totalorder %s22, 0
    %p221 = por %p219, %p220
    %p222 = scmp.ne.s32.totalorder %s210, %s211
    %p223 = scmp.eq.s32.totalorder %s23, 3
    %p224 = por %p222, %p223
    %p226 = scmp.ne.s32.totalorder %s211, %s225
    %p227 = scmp.eq.s32.totalorder %s23, 0
    %p228 = por %p226, %p227
    %s230 = sadd.s32 %s229, 1
    %p233 = scmp.eq.s32.totalorder %s17, 3
    %p234 = scmp.ne.s32.totalorder %s229, %s231
    %p235 = scmp.eq.s32.totalorder %s17, 0
    %p236 = por %p234, %p235
    %p237 = scmp.ne.s32.totalorder %s229, %s231
    %p238 = scmp.eq.s32.totalorder %s22, 3
    %p239 = por %p237, %p238
    %p240 = scmp.ne.s32.totalorder %s231, %s232
    %p241 = scmp.eq.s32.totalorder %s22, 0
    %p242 = por %p240, %p241
    %p243 = scmp.ne.s32.totalorder %s231, %s232
    %p244 = scmp.eq.s32.totalorder %s23, 3
    %p245 = por %p243, %p244
    %p247 = scmp.ne.s32.totalorder %s232, %s246
    %p248 = scmp.eq.s32.totalorder %s23, 0
    %p249 = por %p247, %p248
    %s250 = ssub.s32 %s17, %s24
    %p251 = scmp.eq.s32.totalorder %s250, 0
    %s253 = sadd.s32 %s252, 1
    %s254 = scalar_select %p251, %s252, %s253
    %p257 = pneg %p251
    %p258 = scmp.eq.s32.totalorder %s17, 3
    %p259 = por %p257, %p258
    %p260 = scmp.ne.s32.totalorder %s252, %s255
    %p261 = scmp.eq.s32.totalorder %s17, 0
    %p262 = por %p260, %p261
    %p263 = scmp.ne.s32.totalorder %s252, %s255
    %p264 = scmp.eq.s32.totalorder %s22, 3
    %p265 = por %p263, %p264
    %p266 = scmp.ne.s32.totalorder %s255, %s256
    %p267 = scmp.eq.s32.totalorder %s22, 0
    %p268 = por %p266, %p267
    %p269 = scmp.ne.s32.totalorder %s255, %s256
    %p270 = scmp.eq.s32.totalorder %s23, 3
    %p271 = por %p269, %p270
    %p273 = scmp.ne.s32.totalorder %s256, %s272
    %p274 = scmp.eq.s32.totalorder %s23, 0
    %p275 = por %p273, %p274
    %p276 = scmp.le.s32.totalorder 1, %s17
    %p277 = scmp.lt.s32.totalorder %s17, 5
    %p278 = pnand %p276, %p277
    %p279 = pneg %p278
    // Predicated region
    $region9: #{tpu_custom_call.1} parent=5 // pred_check
      _
    $region10: #{tpu_custom_call.1} parent=5 // pred_check_branch
      %281 = sbr.rel (%p278) target = $region12
    $region11: #{tpu_custom_call.1} parent=5 // pred_region
      %s282 = ssub.s32 %s17, 1
      // Predicated region
      $region13: #{tpu_custom_call.1} parent=11 // pred_check
        %p283 = pneg %p116
      $region14: #{tpu_custom_call.1} parent=11 // pred_check_branch
        %285 = sbr.rel (%p283) target = $region16
      $region15: #{tpu_custom_call.1} parent=11 // pred_region
        _
      $region16: #{tpu_custom_call.1} parent=11 // pred_fallthru
        _
      // Predicated region
      $region17: #{tpu_custom_call.1} parent=11 // pred_check
        %p286 = pneg %p137
      $region18: #{tpu_custom_call.1} parent=11 // pred_check_branch
        %288 = sbr.rel (%p286) target = $region20
      $region19: #{tpu_custom_call.1} parent=11 // pred_region
        _
      $region20: #{tpu_custom_call.1} parent=11 // pred_fallthru
        _
      // Predicated region
      $region21: #{tpu_custom_call.1} parent=11 // pred_check
        %p289 = pneg %p158
      $region22: #{tpu_custom_call.1} parent=11 // pred_check_branch
        %291 = sbr.rel (%p289) target = $region24
      $region23: #{tpu_custom_call.1} parent=11 // pred_region
        _
      $region24: #{tpu_custom_call.1} parent=11 // pred_fallthru
        _
      // Predicated region
      $region25: #{tpu_custom_call.1} parent=11 // pred_check
        %p292 = pneg %p179
      $region26: #{tpu_custom_call.1} parent=11 // pred_check_branch
        %294 = sbr.rel (%p292) target = $region28
      $region27: #{tpu_custom_call.1} parent=11 // pred_region
        _
      $region28: #{tpu_custom_call.1} parent=11 // pred_fallthru
        _
      // Predicated region
      $region29: #{tpu_custom_call.1} parent=11 // pred_check
        %p295 = pneg %p200
      $region30: #{tpu_custom_call.1} parent=11 // pred_check_branch
        %297 = sbr.rel (%p295) target = $region32
      $region31: #{tpu_custom_call.1} parent=11 // pred_region
        _
      $region32: #{tpu_custom_call.1} parent=11 // pred_fallthru
        _
      // Predicated region
      $region33: #{tpu_custom_call.1} parent=11 // pred_check
        %p298 = pneg %p221
      $region34: #{tpu_custom_call.1} parent=11 // pred_check_branch
        %300 = sbr.rel (%p298) target = $region36
      $region35: #{tpu_custom_call.1} parent=11 // pred_region
        _
      $region36: #{tpu_custom_call.1} parent=11 // pred_fallthru
        _
      // Predicated region
      $region37: #{tpu_custom_call.1} parent=11 // pred_check
        %p301 = pneg %p242
      $region38: #{tpu_custom_call.1} parent=11 // pred_check_branch
        %303 = sbr.rel (%p301) target = $region40
      $region39: #{tpu_custom_call.1} parent=11 // pred_region
        _
      $region40: #{tpu_custom_call.1} parent=11 // pred_fallthru
        _
    $region12: #{tpu_custom_call.1} parent=5 // pred_fallthru
      _
    %p304 = scmp.lt.s32.totalorder %s17, 4
    // Predicated region
    $region41: #{tpu_custom_call.1} parent=5 // pred_check
      %p305 = pneg %p304
    $region42: #{tpu_custom_call.1} parent=5 // pred_check_branch
      %307 = sbr.rel (%p305) target = $region44
    $region43: #{tpu_custom_call.1} parent=5 // pred_region
      // Predicated region
      $region45: #{tpu_custom_call.1} parent=43 // pred_check
        %p308 = pneg %p37
      $region46: #{tpu_custom_call.1} parent=43 // pred_check_branch
        %310 = sbr.rel (%p308) target = $region48
      $region47: #{tpu_custom_call.1} parent=43 // pred_region
        %s311 = smul.u32 2, %s17
        %p312 = scmp.lt.s32.totalorder %s311, 7
        %s313 = scalar_select %p312, %s311, 7
        %s314 = smul.addr %s313, 8
        %s315 = scalar_lea.vmem %s0, %s314
        %s316 = smul.u32 2, %s17
      $region48: #{tpu_custom_call.1} parent=43 // pred_fallthru
        _
      // Predicated region
      $region49: #{tpu_custom_call.1} parent=43 // pred_check
        %p317 = pneg %p63
      $region50: #{tpu_custom_call.1} parent=43 // pred_check_branch
        %319 = sbr.rel (%p317) target = $region52
      $region51: #{tpu_custom_call.1} parent=43 // pred_region
        %s320 = smul.u32 2, %s17
        %p321 = scmp.lt.s32.totalorder %s320, 7
        %s322 = scalar_select %p321, %s320, 7
        %s323 = smul.addr %s322, 8
        %s324 = scalar_lea.vmem %s1, %s323
        %s325 = smul.u32 2, %s17
      $region52: #{tpu_custom_call.1} parent=43 // pred_fallthru
        _
      // Predicated region
      $region53: #{tpu_custom_call.1} parent=43 // pred_check
        %p326 = pneg %p89
      $region54: #{tpu_custom_call.1} parent=43 // pred_check_branch
        %328 = sbr.rel (%p326) target = $region56
      $region55: #{tpu_custom_call.1} parent=43 // pred_region
        %s329 = smul.u32 2, %s17
        %p330 = scmp.lt.s32.totalorder %s329, 7
        %s331 = scalar_select %p330, %s329, 7
        %s332 = smul.addr %s331, 2
        %s333 = smul.addr %s332, 4
        %s334 = scalar_lea.vmem %s2, %s333
        %s335 = smul.u32 2, %s17
      $region56: #{tpu_custom_call.1} parent=43 // pred_fallthru
        _
    $region44: #{tpu_custom_call.1} parent=5 // pred_fallthru
      _
    %p336 = scmp.le.s32.totalorder 1, %s17
    %p337 = scmp.lt.s32.totalorder %s17, 5
    %p338 = pnand %p336, %p337
    %p339 = pneg %p338
    // Predicated region
    $region57: #{tpu_custom_call.1} parent=5 // pred_check
      _
    $region58: #{tpu_custom_call.1} parent=5 // pred_check_branch
      %341 = sbr.rel (%p338) target = $region60
    $region59: #{tpu_custom_call.1} parent=5 // pred_region
      %s342 = ssub.s32 %s17, 1
      %s343 = smul.u32 2, %s22
      %p344 = scmp.lt.s32.totalorder %s343, 7
      %s345 = scalar_select %p344, %s343, 7
      %s346 = smul.addr %s345, 8
      %s347 = scalar_lea.vmem %s0, %s346
      %p348 = pneg %p43
      %p349 = pneg %p40
      %s350 = smul.u32 2, %s22
      %p351 = scmp.lt.s32.totalorder %s350, 7
      %s352 = scalar_select %p351, %s350, 7
      %s353 = smul.addr %s352, 8
      %s354 = scalar_lea.vmem %s1, %s353
      %p355 = pneg %p69
      %p356 = pneg %p66
      %s357 = smul.u32 2, %s22
      %p358 = scmp.lt.s32.totalorder %s357, 7
      %s359 = scalar_select %p358, %s357, 7
      %s360 = smul.addr %s359, 2
      %s361 = smul.addr %s360, 4
      %s362 = scalar_lea.vmem %s2, %s361
      %p363 = pneg %p95
      %p364 = pneg %p92
      %p365 = pneg %p116
      %p366 = pneg %p113
      %p367 = pneg %p137
      %p368 = pneg %p134
      %p369 = pneg %p158
      %p370 = pneg %p155
      %p371 = pneg %p179
      %p372 = pneg %p176
      %p373 = pneg %p200
      %p374 = pneg %p197
      %p375 = pneg %p221
      %p376 = pneg %p218
      %p377 = pneg %p242
      %p378 = pneg %p239
      %p379 = pneg %p268
      %p380 = pneg %p265
      %s381 = smul.u32 2, %s22
      %p382 = scmp.lt.s32.totalorder %s381, 7
      %s383 = scalar_select %p382, %s381, 7
      %s384 = smul.addr %s383, 8
      %s385 = scalar_lea.vmem %s10, %s384
      %s386 = smul.u32 2, %s22
      %p387 = scmp.lt.s32.totalorder %s386, 7
      %s388 = scalar_select %p387, %s386, 7
      %s389 = smul.addr %s388, 8
      %s390 = scalar_lea.vmem %s0, %s389
      %s391 = smul.u32 2, %s22
      %s392 = smul.u32 2, %s22
      %p393 = scmp.lt.s32.totalorder %s392, 7
      %s394 = scalar_select %p393, %s392, 7
      %s395 = smul.addr %s394, 8
      %s396 = scalar_lea.vmem %s1, %s395
      %s397 = smul.u32 2, %s22
      %s398 = smul.u32 2, %s22
      %p399 = scmp.lt.s32.totalorder %s398, 7
      %s400 = scalar_select %p399, %s398, 7
      %s401 = smul.addr %s400, 2
      %s402 = smul.addr %s401, 4
      %s403 = scalar_lea.vmem %s2, %s402
      %s404 = smul.u32 2, %s22
      %s405 = smul.u32 2, %s22
      %p406 = scmp.lt.s32.totalorder %s405, 7
      %s407 = scalar_select %p406, %s405, 7
      %s408 = smul.addr %s407, 8
      %s409 = scalar_lea.vmem %s10, %s408
      %s410 = smul.u32 2, %s22
      %v411 = vld [vmem:[%s403] sm:$0xff]
      %v412 = vld [vmem:[%s403 + $0x8] sm:$0xff]
      %v413 = vunpack.c.l.bf16 %v411
      %v414 = vunpack.c.h.bf16 %v411
      %v415 = vunpack.c.l.bf16 %v412
      %v416 = vunpack.c.h.bf16 %v412
      %v417 = vmax.f32 %v413, 0.0
      %v418 = vmax.f32 %v414, 0.0
      %v419 = vmax.f32 %v415, 0.0
      %v420 = vmax.f32 %v416, 0.0
      %v421 = vld [vmem:[%s396] sm:$0xff]
      %v422 = vld [vmem:[%s396 + $0x8] sm:$0xff]
      %v423 = vld [vmem:[%s3] sm:$0xff]
      %v424 = vld [vmem:[%s4] sm:$0x3]
      %v426 = vlaneseq
      %v427 = vshrl.u32 %v426, 7
      %v428 = vsub.s32 0, %v427
      %v429 = vrot.slane %v424, %v428
      %v430 = vlaneseq
      %v431 = vshrl.u32 %v430, 7
      %v432 = vsub.s32 1, %v431
      %v433 = vrot.slane %v424, %v432
      %v437 = vcombine.high %v423, %v423
      %vm438 = vcmask 31744
      %v440 = vsel %vm438, %v421, 0
      %v443 = vsel %vm438, %v422, 0
      %vm445 = vcmask 1043456
      %v446 = vsel %vm445, %v423, 0
      %v448 = vsel %vm445, %v437, 0
      %450 = vmatprep.subr.mxu0 %v448
      %451 = vmatpush1.msra.mxu0 %v446
      %452 = vmatprep.subr.mxu0 0.0
      %453 = vmatpush1.msra.mxu0 0.0
      %454 = vmatprep.subr.mxu0 0.0
      %455 = vmatpush1.msra.mxu0 0.0
      %456 = vmatprep.subr.mxu0 0.0
      %457 = vmatpush1.msra.mxu0 0.0
      %458 = vmatprep.subr.mxu0 0.0
      %459 = vmatpush1.msra.mxu0 0.0
      %460 = vmatprep.subr.mxu0 0.0
      %461 = vmatpush1.msra.mxu0 0.0
      %462 = vmatprep.subr.mxu0 0.0
      %463 = vmatpush1.msra.mxu0 0.0
      %464 = vmatprep.subr.mxu0 0.0
      %465 = vmatpush1.msra.mxu0 0.0
      %466 = vmatprep.subr.mxu0 0.0
      %467 = vmatpush1.msra.mxu0 0.0
      %468 = vmatprep.subr.mxu0 0.0
      %469 = vmatpush1.msra.mxu0 0.0
      %470 = vmatprep.subr.mxu0 0.0
      %471 = vmatpush1.msra.mxu0 0.0
      %472 = vmatprep.subr.mxu0 0.0
      %473 = vmatpush1.msra.mxu0 0.0
      %474 = vmatprep.subr.mxu0 0.0
      %475 = vmatpush1.msra.mxu0 0.0
      %476 = vmatprep.subr.mxu0 0.0
      %477 = vmatpush1.msra.mxu0 0.0
      %478 = vmatprep.subr.mxu0 0.0
      %479 = vmatpush1.msra.mxu0 0.0
      %480 = vmatprep.subr.mxu0 0.0
      %481 = vmatpush1.msra.mxu0 0.0
      %482 = vmatprep.subr.mxu0 0.0
      %483 = vmatpush1.msra.mxu0 0.0
      %484 = vmatprep.subr.mxu0 0.0
      %485 = vmatpush1.msra.mxu0 0.0
      %486 = vmatprep.subr.mxu0 0.0
      %487 = vmatpush1.msra.mxu0 0.0
      %488 = vmatprep.subr.mxu0 0.0
      %489 = vmatpush1.msra.mxu0 0.0
      %490 = vmatprep.subr.mxu0 0.0
      %491 = vmatpush1.msra.mxu0 0.0
      %492 = vmatprep.subr.mxu0 0.0
      %493 = vmatpush1.msra.mxu0 0.0
      %494 = vmatprep.subr.mxu0 0.0
      %495 = vmatpush1.msra.mxu0 0.0
      %496 = vmatprep.subr.mxu0 0.0
      %497 = vmatpush1.msra.mxu0 0.0
      %498 = vmatprep.subr.mxu0 0.0
      %499 = vmatpush1.msra.mxu0 0.0
      %500 = vmatprep.subr.mxu0 0.0
      %501 = vmatpush1.msra.mxu0 0.0
      %502 = vmatprep.subr.mxu0 0.0
      %503 = vmatpush1.msra.mxu0 0.0
      %504 = vmatprep.subr.mxu0 0.0
      %505 = vmatpush1.msra.mxu0 0.0
      %506 = vmatprep.subr.mxu0 0.0
      %507 = vmatpush1.msra.mxu0 0.0
      %508 = vmatprep.subr.mxu0 0.0
      %509 = vmatpush1.msra.mxu0 0.0
      %510 = vmatprep.subr.mxu0 0.0
      %511 = vmatpush1.msra.mxu0 0.0
      %512 = vmatprep.subr.mxu0 0.0
      %513 = vmatpush1.msra.mxu0 0.0
      %514 = vmatprep.mubr.f32.mxu0 0.0
      %515 = vmatmul.mubr.f32.gmra.mrb[0].mxu0 %v440
      %v516 = vpop.f32.mrb[0].mxu0
      %v517 = vadd.f32 %v429, %v516
      %v518 = vpop.f32.mrb[0].mxu0
      %v519 = vadd.f32 %v433, %v518
      %520 = vmatprep.mubr.f32.mxu0 0.0
      %521 = vmatmul.mubr.f32.gmra.mrb[0].mxu0 %v443
      %v522 = vpop.f32.mrb[0].mxu0
      %v523 = vadd.f32 %v429, %v522
      %v524 = vpop.f32.mrb[0].mxu0
      %v525 = vadd.f32 %v433, %v524
      %526 = vdwg.mxu0
      %v527 = vmax.f32 %v517, 0.0
      %v528 = vmax.f32 %v519, 0.0
      %v529 = vmax.f32 %v523, 0.0
      %v530 = vmax.f32 %v525, 0.0
      %v531 = vld [vmem:[%s5] sm:$0xff]
      %v532 = vld [vmem:[%s5 + $0x8] sm:$0xff]
      %v533 = vld [vmem:[%s5 + $0x10] sm:$0xff]
      %v534 = vld [vmem:[%s5 + $0x18] sm:$0xff]
      %v535 = vld [vmem:[%s5 + $0x20] sm:$0xff]
      %v536 = vld [vmem:[%s5 + $0x28] sm:$0xff]
      %v537 = vld [vmem:[%s5 + $0x30] sm:$0xff]
      %v538 = vld [vmem:[%s5 + $0x38] sm:$0xff]
      %v539 = vld [vmem:[%s5 + $0x40] sm:$0xff]
      %v540 = vld [vmem:[%s5 + $0x48] sm:$0xff]
      %v541 = vld [vmem:[%s5 + $0x50] sm:$0xff]
      %v542 = vld [vmem:[%s5 + $0x58] sm:$0xff]
      %v543 = vld [vmem:[%s5 + $0x60] sm:$0xff]
      %v544 = vld [vmem:[%s5 + $0x68] sm:$0xff]
      %v545 = vld [vmem:[%s5 + $0x70] sm:$0xff]
      %v546 = vld [vmem:[%s5 + $0x78] sm:$0xff]
      %v547 = vld [vmem:[%s5 + $0x80] sm:$0xff]
      %v548 = vld [vmem:[%s5 + $0x88] sm:$0xff]
      %v549 = vld [vmem:[%s5 + $0x90] sm:$0xff]
      %v550 = vld [vmem:[%s5 + $0x98] sm:$0xff]
      %v551 = vld [vmem:[%s5 + $0xa0] sm:$0xff]
      %v552 = vld [vmem:[%s5 + $0xa8] sm:$0xff]
      %v553 = vld [vmem:[%s5 + $0xb0] sm:$0xff]
      %v554 = vld [vmem:[%s5 + $0xb8] sm:$0xff]
      %v555 = vld [vmem:[%s5 + $0xc0] sm:$0xff]
      %v556 = vld [vmem:[%s5 + $0xc8] sm:$0xff]
      %v557 = vld [vmem:[%s5 + $0xd0] sm:$0xff]
      %v558 = vld [vmem:[%s5 + $0xd8] sm:$0xff]
      %v559 = vld [vmem:[%s5 + $0xe0] sm:$0xff]
      %v560 = vld [vmem:[%s5 + $0xe8] sm:$0xff]
      %v561 = vld [vmem:[%s5 + $0xf0] sm:$0xff]
      %v562 = vld [vmem:[%s5 + $0xf8] sm:$0xff]
      %v563 = vld [vmem:[%s5 + $0x100] sm:$0xff]
      %v564 = vld [vmem:[%s5 + $0x108] sm:$0xff]
      %v565 = vld [vmem:[%s5 + $0x110] sm:$0xff]
      %v566 = vld [vmem:[%s5 + $0x118] sm:$0xff]
      %v567 = vld [vmem:[%s5 + $0x120] sm:$0xff]
      %v568 = vld [vmem:[%s5 + $0x128] sm:$0xff]
      %v569 = vld [vmem:[%s5 + $0x130] sm:$0xff]
      %v570 = vld [vmem:[%s5 + $0x138] sm:$0xff]
      %v571 = vld [vmem:[%s5 + $0x140] sm:$0xff]
      %v572 = vld [vmem:[%s5 + $0x148] sm:$0xff]
      %v573 = vld [vmem:[%s5 + $0x150] sm:$0xff]
      %v574 = vld [vmem:[%s5 + $0x158] sm:$0xff]
      %v575 = vld [vmem:[%s5 + $0x160] sm:$0xff]
      %v576 = vld [vmem:[%s5 + $0x168] sm:$0xff]
      %v577 = vld [vmem:[%s5 + $0x170] sm:$0xff]
      %v578 = vld [vmem:[%s5 + $0x178] sm:$0xff]
      %v579 = vld [vmem:[%s5 + $0x180] sm:$0xff]
      %v580 = vld [vmem:[%s5 + $0x188] sm:$0xff]
      %v581 = vld [vmem:[%s5 + $0x190] sm:$0xff]
      %v582 = vld [vmem:[%s5 + $0x198] sm:$0xff]
      %v583 = vld [vmem:[%s5 + $0x1a0] sm:$0xff]
      %v584 = vld [vmem:[%s5 + $0x1a8] sm:$0xff]
      %v585 = vld [vmem:[%s5 + $0x1b0] sm:$0xff]
      %v586 = vld [vmem:[%s5 + $0x1b8] sm:$0xff]
      %v587 = vld [vmem:[%s5 + $0x1c0] sm:$0xff]
      %v588 = vld [vmem:[%s5 + $0x1c8] sm:$0xff]
      %v589 = vld [vmem:[%s5 + $0x1d0] sm:$0xff]
      %v590 = vld [vmem:[%s5 + $0x1d8] sm:$0xff]
      %v591 = vld [vmem:[%s5 + $0x1e0] sm:$0xff]
      %v592 = vld [vmem:[%s5 + $0x1e8] sm:$0xff]
      %v593 = vld [vmem:[%s5 + $0x1f0] sm:$0xff]
      %v594 = vld [vmem:[%s5 + $0x1f8] sm:$0xff]
      %v595 = vld [vmem:[%s6] sm:$0x1]
      %v597 = vlaneseq
      %v598 = vshrl.u32 %v597, 7
      %v599 = vsub.s32 0, %v598
      %v600 = vrot.slane %v595, %v599
      %602 = vmatprep.subr.mxu0 0.0
      %603 = vmatpush1.msra.mxu0 %v531
      %604 = vmatprep.subr.mxu0 0.0
      %605 = vmatpush1.msra.mxu0 %v532
      %606 = vmatprep.subr.mxu0 0.0
      %607 = vmatpush1.msra.mxu0 %v533
      %608 = vmatprep.subr.mxu0 0.0
      %609 = vmatpush1.msra.mxu0 %v534
      %610 = vmatprep.subr.mxu0 0.0
      %611 = vmatpush1.msra.mxu0 %v535
      %612 = vmatprep.subr.mxu0 0.0
      %613 = vmatpush1.msra.mxu0 %v536
      %614 = vmatprep.subr.mxu0 0.0
      %615 = vmatpush1.msra.mxu0 %v537
      %616 = vmatprep.subr.mxu0 0.0
      %617 = vmatpush1.msra.mxu0 %v538
      %618 = vmatprep.subr.mxu0 0.0
      %619 = vmatpush1.msra.mxu0 %v539
      %620 = vmatprep.subr.mxu0 0.0
      %621 = vmatpush1.msra.mxu0 %v540
      %622 = vmatprep.subr.mxu0 0.0
      %623 = vmatpush1.msra.mxu0 %v541
      %624 = vmatprep.subr.mxu0 0.0
      %625 = vmatpush1.msra.mxu0 %v542
      %626 = vmatprep.subr.mxu0 0.0
      %627 = vmatpush1.msra.mxu0 %v543
      %628 = vmatprep.subr.mxu0 0.0
      %629 = vmatpush1.msra.mxu0 %v544
      %630 = vmatprep.subr.mxu0 0.0
      %631 = vmatpush1.msra.mxu0 %v545
      %632 = vmatprep.subr.mxu0 0.0
      %633 = vmatpush1.msra.mxu0 %v546
      %634 = vmatprep.subr.mxu0 0.0
      %635 = vmatpush1.msra.mxu0 %v547
      %636 = vmatprep.subr.mxu0 0.0
      %637 = vmatpush1.msra.mxu0 %v548
      %638 = vmatprep.subr.mxu0 0.0
      %639 = vmatpush1.msra.mxu0 %v549
      %640 = vmatprep.subr.mxu0 0.0
      %641 = vmatpush1.msra.mxu0 %v550
      %642 = vmatprep.subr.mxu0 0.0
      %643 = vmatpush1.msra.mxu0 %v551
      %644 = vmatprep.subr.mxu0 0.0
      %645 = vmatpush1.msra.mxu0 %v552
      %646 = vmatprep.subr.mxu0 0.0
      %647 = vmatpush1.msra.mxu0 %v553
      %648 = vmatprep.subr.mxu0 0.0
      %649 = vmatpush1.msra.mxu0 %v554
      %650 = vmatprep.subr.mxu0 0.0
      %651 = vmatpush1.msra.mxu0 %v555
      %652 = vmatprep.subr.mxu0 0.0
      %653 = vmatpush1.msra.mxu0 %v556
      %654 = vmatprep.subr.mxu0 0.0
      %655 = vmatpush1.msra.mxu0 %v557
      %656 = vmatprep.subr.mxu0 0.0
      %657 = vmatpush1.msra.mxu0 %v558
      %658 = vmatprep.subr.mxu0 0.0
      %659 = vmatpush1.msra.mxu0 %v559
      %660 = vmatprep.subr.mxu0 0.0
      %661 = vmatpush1.msra.mxu0 %v560
      %662 = vmatprep.subr.mxu0 0.0
      %663 = vmatpush1.msra.mxu0 %v561
      %664 = vmatprep.subr.mxu0 0.0
      %665 = vmatpush1.msra.mxu0 %v562
      %666 = vmatprep.mubr.f32.mxu0 %v418
      %667 = vmatmul.mubr.f32.gmra.mrb[0].mxu0 %v417
      %v668 = vpop.f32.mrb[0].mxu0
      %v669 = vadd.f32 %v600, %v668
      %v670 = vpop.f32.mrb[0].mxu0
      %671 = vmatprep.mubr.f32.mxu0 %v420
      %672 = vmatmul.mubr.f32.gmra.mrb[0].mxu0 %v419
      %v673 = vpop.f32.mrb[0].mxu0
      %v674 = vadd.f32 %v600, %v673
      %v675 = vpop.f32.mrb[0].mxu0
      %676 = vdwg.mxu0
      %677 = vmatprep.subr.mxu0 0.0
      %678 = vmatpush1.msra.mxu0 %v563
      %679 = vmatprep.subr.mxu0 0.0
      %680 = vmatpush1.msra.mxu0 %v564
      %681 = vmatprep.subr.mxu0 0.0
      %682 = vmatpush1.msra.mxu0 %v565
      %683 = vmatprep.subr.mxu0 0.0
      %684 = vmatpush1.msra.mxu0 %v566
      %685 = vmatprep.subr.mxu0 0.0
      %686 = vmatpush1.msra.mxu0 %v567
      %687 = vmatprep.subr.mxu0 0.0
      %688 = vmatpush1.msra.mxu0 %v568
      %689 = vmatprep.subr.mxu0 0.0
      %690 = vmatpush1.msra.mxu0 %v569
      %691 = vmatprep.subr.mxu0 0.0
      %692 = vmatpush1.msra.mxu0 %v570
      %693 = vmatprep.subr.mxu0 0.0
      %694 = vmatpush1.msra.mxu0 %v571
      %695 = vmatprep.subr.mxu0 0.0
      %696 = vmatpush1.msra.mxu0 %v572
      %697 = vmatprep.subr.mxu0 0.0
      %698 = vmatpush1.msra.mxu0 %v573
      %699 = vmatprep.subr.mxu0 0.0
      %700 = vmatpush1.msra.mxu0 %v574
      %701 = vmatprep.subr.mxu0 0.0
      %702 = vmatpush1.msra.mxu0 %v575
      %703 = vmatprep.subr.mxu0 0.0
      %704 = vmatpush1.msra.mxu0 %v576
      %705 = vmatprep.subr.mxu0 0.0
      %706 = vmatpush1.msra.mxu0 %v577
      %707 = vmatprep.subr.mxu0 0.0
      %708 = vmatpush1.msra.mxu0 %v578
      %709 = vmatprep.subr.mxu0 0.0
      %710 = vmatpush1.msra.mxu0 %v579
      %711 = vmatprep.subr.mxu0 0.0
      %712 = vmatpush1.msra.mxu0 %v580
      %713 = vmatprep.subr.mxu0 0.0
      %714 = vmatpush1.msra.mxu0 %v581
      %715 = vmatprep.subr.mxu0 0.0
      %716 = vmatpush1.msra.mxu0 %v582
      %717 = vmatprep.subr.mxu0 0.0
      %718 = vmatpush1.msra.mxu0 %v583
      %719 = vmatprep.subr.mxu0 0.0
      %720 = vmatpush1.msra.mxu0 %v584
      %721 = vmatprep.subr.mxu0 0.0
      %722 = vmatpush1.msra.mxu0 %v585
      %723 = vmatprep.subr.mxu0 0.0
      %724 = vmatpush1.msra.mxu0 %v586
      %725 = vmatprep.subr.mxu0 0.0
      %726 = vmatpush1.msra.mxu0 %v587
      %727 = vmatprep.subr.mxu0 0.0
      %728 = vmatpush1.msra.mxu0 %v588
      %729 = vmatprep.subr.mxu0 0.0
      %730 = vmatpush1.msra.mxu0 %v589
      %731 = vmatprep.subr.mxu0 0.0
      %732 = vmatpush1.msra.mxu0 %v590
      %733 = vmatprep.subr.mxu0 0.0
      %734 = vmatpush1.msra.mxu0 %v591
      %735 = vmatprep.subr.mxu0 0.0
      %736 = vmatpush1.msra.mxu0 %v592
      %737 = vmatprep.subr.mxu0 0.0
      %738 = vmatpush1.msra.mxu0 %v593
      %739 = vmatprep.subr.mxu0 0.0
      %740 = vmatpush1.msra.mxu0 %v594
      %741 = vmatprep.mubr.f32.mxu0 %v528
      %742 = vmatmul.mubr.f32.gmra.mrb[0].mxu0 %v527
      %v743 = vpop.f32.mrb[0].mxu0
      %v744 = vadd.f32 %v669, %v743
      %v745 = vpop.f32.mrb[0].mxu0
      %746 = vmatprep.mubr.f32.mxu0 %v530
      %747 = vmatmul.mubr.f32.gmra.mrb[0].mxu0 %v529
      %v748 = vpop.f32.mrb[0].mxu0
      %v749 = vadd.f32 %v674, %v748
      %v750 = vpop.f32.mrb[0].mxu0
      %751 = vdwg.mxu0
      %v752 = vld [vmem:[%s7] sm:$0xff]
      %v753 = vld [vmem:[%s7 + $0x8] sm:$0xff]
      %v754 = vld [vmem:[%s7 + $0x10] sm:$0xff]
      %v755 = vld [vmem:[%s7 + $0x18] sm:$0xff]
      %v756 = vld [vmem:[%s7 + $0x20] sm:$0xff]
      %v757 = vld [vmem:[%s7 + $0x28] sm:$0xff]
      %v758 = vld [vmem:[%s7 + $0x30] sm:$0xff]
      %v759 = vld [vmem:[%s7 + $0x38] sm:$0xff]
      %vm760 = vcmask 523264
      %v762 = vsel %vm760, %v744, 0
      %v765 = vsel %vm760, %v749, 0
      %767 = vmatprep.subr.mxu0 0.0
      %768 = vmatpush1.msra.mxu0 %v752
      %769 = vmatprep.subr.mxu0 0.0
      %770 = vmatpush1.msra.mxu0 %v753
      %771 = vmatprep.subr.mxu0 0.0
      %772 = vmatpush1.msra.mxu0 %v754
      %773 = vmatprep.subr.mxu0 0.0
      %774 = vmatpush1.msra.mxu0 %v755
      %775 = vmatprep.subr.mxu0 0.0
      %776 = vmatpush1.msra.mxu0 %v756
      %777 = vmatprep.subr.mxu0 0.0
      %778 = vmatpush1.msra.mxu0 %v757
      %779 = vmatprep.subr.mxu0 0.0
      %780 = vmatpush1.msra.mxu0 %v758
      %781 = vmatprep.subr.mxu0 0.0
      %782 = vmatpush1.msra.mxu0 %v759
      %783 = vmatprep.subr.mxu0 0.0
      %784 = vmatpush1.msra.mxu0 0.0
      %785 = vmatprep.subr.mxu0 0.0
      %786 = vmatpush1.msra.mxu0 0.0
      %787 = vmatprep.subr.mxu0 0.0
      %788 = vmatpush1.msra.mxu0 0.0
      %789 = vmatprep.subr.mxu0 0.0
      %790 = vmatpush1.msra.mxu0 0.0
      %791 = vmatprep.subr.mxu0 0.0
      %792 = vmatpush1.msra.mxu0 0.0
      %793 = vmatprep.subr.mxu0 0.0
      %794 = vmatpush1.msra.mxu0 0.0
      %795 = vmatprep.subr.mxu0 0.0
      %796 = vmatpush1.msra.mxu0 0.0
      %797 = vmatprep.subr.mxu0 0.0
      %798 = vmatpush1.msra.mxu0 0.0
      %799 = vmatprep.subr.mxu0 0.0
      %800 = vmatpush1.msra.mxu0 0.0
      %801 = vmatprep.subr.mxu0 0.0
      %802 = vmatpush1.msra.mxu0 0.0
      %803 = vmatprep.subr.mxu0 0.0
      %804 = vmatpush1.msra.mxu0 0.0
      %805 = vmatprep.subr.mxu0 0.0
      %806 = vmatpush1.msra.mxu0 0.0
      %807 = vmatprep.subr.mxu0 0.0
      %808 = vmatpush1.msra.mxu0 0.0
      %809 = vmatprep.subr.mxu0 0.0
      %810 = vmatpush1.msra.mxu0 0.0
      %811 = vmatprep.subr.mxu0 0.0
      %812 = vmatpush1.msra.mxu0 0.0
      %813 = vmatprep.subr.mxu0 0.0
      %814 = vmatpush1.msra.mxu0 0.0
      %815 = vmatprep.subr.mxu0 0.0
      %816 = vmatpush1.msra.mxu0 0.0
      %817 = vmatprep.subr.mxu0 0.0
      %818 = vmatpush1.msra.mxu0 0.0
      %819 = vmatprep.subr.mxu0 0.0
      %820 = vmatpush1.msra.mxu0 0.0
      %821 = vmatprep.subr.mxu0 0.0
      %822 = vmatpush1.msra.mxu0 0.0
      %823 = vmatprep.subr.mxu0 0.0
      %824 = vmatpush1.msra.mxu0 0.0
      %825 = vmatprep.subr.mxu0 0.0
      %826 = vmatpush1.msra.mxu0 0.0
      %827 = vmatprep.subr.mxu0 0.0
      %828 = vmatpush1.msra.mxu0 0.0
      %829 = vmatprep.subr.mxu0 0.0
      %830 = vmatpush1.msra.mxu0 0.0
      %831 = vmatprep.mubr.f32.mxu0 0.0
      %832 = vmatmul.mubr.f32.gmra.mrb[0].mxu0 %v762
      %v833 = vpop.f32.mrb[0].mxu0
      %v834 = vadd.f32 0.0, %v833
      %v835 = vpop.f32.mrb[0].mxu0
      %836 = vmatprep.mubr.f32.mxu0 0.0
      %837 = vmatmul.mubr.f32.gmra.mrb[0].mxu0 %v765
      %v838 = vpop.f32.mrb[0].mxu0
      %v839 = vadd.f32 0.0, %v838
      %v840 = vpop.f32.mrb[0].mxu0
      %841 = vdwg.mxu0
      %v842 = vsub.f32 %v834, %v744
      %v843 = vsub.f32 %v839, %v749
      %v844 = vmul.f32 %v744, %v842
      %v845 = vmul.f32 %v749, %v843
      %v846 = vsel %vm760, %v844, 0.0
      %847 = vadd.xlane.f32.xlu0 %v846
      %v848 = vpop.xlane.xlu0 %847
      %v849 = vsel %vm760, %v845, 0.0
      %850 = vadd.xlane.f32.xlu0 %v849
      %v851 = vpop.xlane.xlu0 %850
      %v852 = vmul.f32 %v848, 0.5
      %v853 = vmul.f32 %v851, 0.5
      %v854 = vld [vmem:[%s390] sm:$0xff]
      %v855 = vld [vmem:[%s390 + $0x8] sm:$0xff]
      %v856 = vsel %vm438, %v854, 0.0
      %857 = vadd.xlane.f32.xlu0 %v856
      %v858 = vpop.xlane.xlu0 %857
      %v859 = vsel %vm438, %v855, 0.0
      %860 = vadd.xlane.f32.xlu0 %v859
      %v861 = vpop.xlane.xlu0 %860
      %v862 = vld [vmem:[%s8] sm:$0x1]
      %v864 = vlaneseq
      %v865 = vshrl.u32 %v864, 7
      %v866 = vsub.s32 0, %v865
      %v867 = vrot.slane %v862, %v866
      %v869 = vmul.f32 %v421, %v867
      %v870 = vmul.f32 %v422, %v867
      %v871 = vsel %vm438, %v869, 0.0
      %872 = vadd.xlane.f32.xlu0 %v871
      %v873 = vpop.xlane.xlu0 %872
      %v874 = vsel %vm438, %v870, 0.0
      %875 = vadd.xlane.f32.xlu0 %v874
      %v876 = vpop.xlane.xlu0 %875
      %v877 = vadd.f32 %v858, %v873
      %v878 = vadd.f32 %v861, %v876
      %s879 = sld [smem:[#allocation2]]
      %v880 = vstv %s879
      %v881 = vadd.f32 %v877, %v880
      %v882 = vadd.f32 %v878, %v880
      %v883 = vadd.f32 %v881, %v852
      %v884 = vadd.f32 %v882, %v853
      %vm885 = vcmask 7168
      %886 = vst.msk [vmem:[%s409] sm:$0xff] %vm885, %v883
      %887 = vst.msk [vmem:[%s409 + $0x8] sm:$0xff] %vm885, %v884
      %s888 = smul.u32 2, %s22
      %p889 = scmp.lt.s32.totalorder %s888, 7
      %s890 = scalar_select %p889, %s888, 7
      %s891 = smul.addr %s890, 8
      %s892 = scalar_lea.vmem %s10, %s891
      // Predicated region
      $region61: #{tpu_custom_call.1} parent=59 // pred_check
        %p893 = pneg %p265
      $region62: #{tpu_custom_call.1} parent=59 // pred_check_branch
        %895 = sbr.rel (%p893) target = $region64
      $region63: #{tpu_custom_call.1} parent=59 // pred_region
        %s896 = smul.u32 2, %s22
      $region64: #{tpu_custom_call.1} parent=59 // pred_fallthru
        _
    $region60: #{tpu_custom_call.1} parent=5 // pred_fallthru
      _
    %p897 = scmp.le.s32.totalorder 2, %s17
    // Predicated region
    $region65: #{tpu_custom_call.1} parent=5 // pred_check
      %p898 = pneg %p897
    $region66: #{tpu_custom_call.1} parent=5 // pred_check_branch
      %900 = sbr.rel (%p898) target = $region68
    $region67: #{tpu_custom_call.1} parent=5 // pred_region
      %s901 = ssub.s32 %s17, 2
      // Predicated region
      $region69: #{tpu_custom_call.1} parent=67 // pred_check
        %p902 = pneg %p271
      $region70: #{tpu_custom_call.1} parent=67 // pred_check_branch
        %904 = sbr.rel (%p902) target = $region72
      $region71: #{tpu_custom_call.1} parent=67 // pred_region
        %s905 = smul.u32 2, %s23
        %p906 = scmp.lt.s32.totalorder %s905, 7
        %s907 = scalar_select %p906, %s905, 7
        %s908 = smul.addr %s907, 8
        %s909 = scalar_lea.vmem %s10, %s908
      $region72: #{tpu_custom_call.1} parent=67 // pred_fallthru
        _
    $region68: #{tpu_custom_call.1} parent=5 // pred_fallthru
      _
  $region6: #{tpu_custom_call.1} parent=0 // loop_footer
    %s21 = sadd.s32 1, %s17
  $region7: #{tpu_custom_call.1} parent=0 // loop_footer_branch
    %16 = sbr.rel target = $region3
  $region8: #{tpu_custom_call.1} parent=0 // loop_exit
    _

</llo_original>
